<compile_context>
chip_gen: v5e
topology: v5e:2x2
jax: 0.10.0
libtpu: 0.0.40
codegen_flags: <defaults>
</compile_context>

<pallas_src>
import jax
import jax.numpy as jnp
from jax import lax
from jax.experimental import pallas as pl
from jax.experimental.pallas import tpu as pltpu


HIDDEN = 30        # fc1 output features (PyTorch module)
HIDDEN_PAD = 32    # padded to a sublane multiple
BIAS_ROW = HIDDEN  # padded hidden unit used as a constant-1 feature (b2 fold)


def anet_kernel(xt_ref, w1_ref, b1_ref, w2_ref, o_ref):
    """xt_ref: (s_dim, TB) feature-major; w1_ref: (HIDDEN_PAD, s_dim);
    b1_ref: (HIDDEN_PAD, 1) f32 (row BIAS_ROW == 1 for the b2 fold);
    w2_ref: (a_dim, HIDDEN_PAD) f32 with b2 folded into column BIAS_ROW;
    o_ref: (a_dim, TB)."""
    # fc1, native MXU orientation: h_t[f, b] = sum_k W1[f, k] * x_t[k, b]
    h_t = jnp.dot(w1_ref[...], xt_ref[...],
                  preferred_element_type=jnp.float32)        # (HIDDEN_PAD, TB) f32
    h_t = jnp.maximum(h_t + b1_ref[...], 0.0)                # bias + relu in f32

    # Output layer; b2 arrives through the constant-1 hidden row -> no VPU add.
    y_t = jnp.dot(w2_ref[...], h_t,
                  preferred_element_type=jnp.float32)        # (a_dim, TB) f32
    o_ref[...] = (jnp.tanh(y_t) * 2.0).astype(o_ref.dtype)


def prepare_params(w1, b1, w2, b2, *, stream_dtype=jnp.bfloat16):
    """Pack PyTorch-layout params for the kernel.

    w1: (HIDDEN, s_dim), b1: (HIDDEN,), w2: (a_dim, HIDDEN), b2: (a_dim,).
    W1 is zero-padded HIDDEN->HIDDEN_PAD and cast to `stream_dtype` (must match
    the dtype x is streamed in).  b1 stays f32 as a (HIDDEN_PAD, 1) column with
    b1[BIAS_ROW] = 1 so relu produces an exact constant-1 hidden feature; b2 is
    folded into column BIAS_ROW of an f32 W2.  Padding is exact through
    relu/tanh, so results match the unpadded module.
    """
    hidden, s_dim = w1.shape
    a_dim = w2.shape[0]
    assert hidden == HIDDEN and w2.shape[1] == HIDDEN

    w1p = jnp.zeros((HIDDEN_PAD, s_dim), stream_dtype).at[:hidden, :].set(
        w1.astype(stream_dtype))
    b1p = jnp.zeros((HIDDEN_PAD, 1), jnp.float32).at[:hidden, 0].set(
        b1.astype(jnp.float32))
    b1p = b1p.at[BIAS_ROW, 0].set(1.0)                 # constant-1 hidden unit
    w2p = jnp.zeros((a_dim, HIDDEN_PAD), jnp.float32).at[:, :hidden].set(
        w2.astype(jnp.float32))
    w2p = w2p.at[:, BIAS_ROW].set(b2.astype(jnp.float32))   # fold b2 into MXU
    return (w1p, b1p, w2p, a_dim)


def _cost_estimate(batch, s_dim, a_dim, x_itemsize, out_itemsize):
    flops = 2 * batch * (HIDDEN_PAD * s_dim + a_dim * HIDDEN_PAD)
    bytes_accessed = (batch * s_dim * x_itemsize                      # x stream
                      + HIDDEN_PAD * s_dim * 4 + a_dim * HIDDEN_PAD * 4
                      + HIDDEN_PAD * 4                                # bias
                      + a_dim * batch * out_itemsize)                 # output
    return pl.CostEstimate(flops=int(flops),
                           transcendentals=int(batch * a_dim),
                           bytes_accessed=int(bytes_accessed))


def anet_forward_fm(x_t, params, *, block_b_max=32768,
                    out_dtype=jnp.bfloat16, small_batch_cutoff=1024):
    """Fast path. x_t: feature-major states (s_dim, B) in the stream dtype;
    params from prepare_params().  Returns action-major (a_dim, B) actions
    in `out_dtype` -- consumers (critic / replay) should accept this layout."""
    w1p, b1p, w2p, a_dim = params
    s_dim, batch = x_t.shape
    x_t = x_t.astype(w1p.dtype)   # explicit stream-dtype contract (bf16 default)
    ce = _cost_estimate(batch, s_dim, a_dim, x_t.dtype.itemsize,
                        jnp.dtype(out_dtype).itemsize)

    if batch <= small_batch_cutoff:
        # Tiny batch: no grid / pipeline -- full arrays as single VMEM blocks.
        # TODO(synk): for B~1 actor inference, letting XLA fuse this MLP into
        # the surrounding act() step can beat any custom call; kept in Pallas
        # here so the kernel path is exercised.
        return pl.pallas_call(
            anet_kernel,
            out_shape=jax.ShapeDtypeStruct((a_dim, batch), out_dtype),
            in_specs=[pl.BlockSpec(memory_space=pltpu.MemorySpace.VMEM)] * 4,
            out_specs=pl.BlockSpec(memory_space=pltpu.MemorySpace.VMEM),
            cost_estimate=ce,
        )(x_t, w1p, b1p, w2p)

    # Gridded path: big lane blocks; at least 2 blocks so the "parallel" batch
    # axis shards across both TensorCores on v7x (neutral on v5e/v6e).
    half = -(-batch // 2)
    half = -(-half // 128) * 128
    block_b = max(128, min(block_b_max, half))
    n_blocks = pl.cdiv(batch, block_b)     # ragged last block: masked by Pallas

    return pl.pallas_call(
        anet_kernel,
        out_shape=jax.ShapeDtypeStruct((a_dim, batch), out_dtype),
        grid=(n_blocks,),
        in_specs=[
            pl.BlockSpec((s_dim, block_b), lambda i: (0, i)),       # x streamed
            pl.BlockSpec((HIDDEN_PAD, s_dim), lambda i: (0, 0)),    # resident
            pl.BlockSpec((HIDDEN_PAD, 1), lambda i: (0, 0)),        # resident
            pl.BlockSpec((w2p.shape[0], HIDDEN_PAD), lambda i: (0, 0)),
        ],
        out_specs=pl.BlockSpec((a_dim, block_b), lambda i: (0, i)),
        compiler_params=pltpu.CompilerParams(
            dimension_semantics=("parallel",)),
        cost_estimate=ce,
    )(x_t, w1p, b1p, w2p)


def anet_forward(x, params, **kwargs):
    """Batch-major compatibility wrapper: x (B, s_dim) -> (B, a_dim).
    The two transposes are extra XLA passes over HBM; prefer anet_forward_fm
    with a feature-major replay buffer for hot paths."""
    return anet_forward_fm(x.T, params, **kwargs).T


def init_anet_params(key, s_dim, a_dim):
    """Mirror the PyTorch module init: weights ~ N(0, 0.1); biases use the
    nn.Linear default U(-1/sqrt(fan_in), 1/sqrt(fan_in))."""
    k1, k2, k3, k4 = jax.random.split(key, 4)
    w1 = 0.1 * jax.random.normal(k1, (HIDDEN, s_dim), dtype=jnp.float32)
    w2 = 0.1 * jax.random.normal(k2, (a_dim, HIDDEN), dtype=jnp.float32)
    bound1 = 1.0 / float(s_dim) ** 0.5
    bound2 = 1.0 / float(HIDDEN) ** 0.5
    b1 = jax.random.uniform(k3, (HIDDEN,), jnp.float32, -bound1, bound1)
    b2 = jax.random.uniform(k4, (a_dim,), jnp.float32, -bound2, bound2)
    return w1, b1, w2, b2


def anet_reference(x, w1, b1, w2, b2):
    """Pure-JAX reference (f32, highest matmul precision)."""
    h = jnp.maximum(jnp.dot(x, w1.T, precision=lax.Precision.HIGHEST) + b1, 0.0)
    y = jnp.dot(h, w2.T, precision=lax.Precision.HIGHEST) + b2
    return jnp.tanh(y) * 2.0


if __name__ == "__main__":
    s_dim, a_dim = 8, 4
    key = jax.random.PRNGKey(0)
    kx, kb, kp = jax.random.split(key, 3)
    w1, b1, w2, b2 = init_anet_params(kp, s_dim, a_dim)

    # --- 1) Tiny batch (actor inference): f32 stream/output, grid-less path. ---
    batch_small = 2
    x_small = jax.random.normal(kx, (batch_small, s_dim), dtype=jnp.float32)
    params_f32 = prepare_params(w1, b1, w2, b2, stream_dtype=jnp.float32)
    out_small = jax.block_until_ready(
        anet_forward(x_small, params_f32, out_dtype=jnp.float32))
    ref_small = anet_reference(x_small, w1, b1, w2, b2)
    assert out_small.shape == (batch_small, a_dim)
    assert jnp.allclose(out_small, ref_small, atol=1e-4, rtol=1e-4), \
        "small-batch mismatch vs reference"

    # --- 2) Batched path: bf16 feature-major x, bf16 output, ragged batch. ---
    batch_big = 2000          # not a multiple of the block -> masked last block
    x_big = jax.random.normal(kb, (batch_big, s_dim), dtype=jnp.float32)
    params_bf16 = prepare_params(w1, b1, w2, b2, stream_dtype=jnp.bfloat16)
    x_big_fm = x_big.T.astype(jnp.bfloat16)   # feature-major replay-buffer layout
    out_big_fm = jax.block_until_ready(
        anet_forward_fm(x_big_fm, params_bf16, block_b_max=512))
    # Reference with the same bf16 rounding of x / W1; math in f32.
    rnd = lambda a: a.astype(jnp.bfloat16).astype(jnp.float32)
    ref_big = anet_reference(rnd(x_big), rnd(w1), b1, w2, b2)
    assert out_big_fm.shape == (a_dim, batch_big)
    assert jnp.allclose(out_big_fm.astype(jnp.float32).T, ref_big,
                        atol=2e-2, rtol=2e-2), "batched mismatch vs reference"

    print("KERNEL_OK")
</pallas_src>

<mosaic_0001>
module attributes {stable_mosaic.version = 11 : i64} {
  func.func @anet_kernel(%arg0: memref<8x2xf32, #tpu.memory_space<vmem>>, %arg1: memref<32x8xf32, #tpu.memory_space<vmem>>, %arg2: memref<32x1xf32, #tpu.memory_space<vmem>>, %arg3: memref<4x32xf32, #tpu.memory_space<vmem>>, %arg4: memref<4x2xf32, #tpu.memory_space<vmem>>) attributes {dimension_semantics = [], scalar_prefetch = 0 : i64, scratch_operands = 0 : i64, tpu.core_type = #tpu.core_type<tc>} {
    %c0 = arith.constant 0 : index
    %c0_0 = arith.constant 0 : index
    %0 = vector.load %arg1[%c0, %c0_0] : memref<32x8xf32, #tpu.memory_space<vmem>>, vector<32x8xf32>
    %c0_1 = arith.constant 0 : index
    %c0_2 = arith.constant 0 : index
    %1 = vector.load %arg0[%c0_1, %c0_2] : memref<8x2xf32, #tpu.memory_space<vmem>>, vector<8x2xf32>
    %cst = arith.constant dense<0.000000e+00> : vector<32x2xf32>
    %2 = tpu.matmul %0, %1, %cst {dimension_numbers = #tpu.dot_dimension_numbers<[1], [0], [0], [1], [0, 0, 1, 1], [], []>} : vector<32x8xf32>, vector<8x2xf32>, vector<32x2xf32> -> vector<32x2xf32>
    %c0_3 = arith.constant 0 : index
    %c0_4 = arith.constant 0 : index
    %3 = vector.load %arg2[%c0_3, %c0_4] : memref<32x1xf32, #tpu.memory_space<vmem>>, vector<32x1xf32>
    %4 = vector.broadcast %3 : vector<32x1xf32> to vector<32x2xf32>
    %5 = arith.addf %2, %4 : vector<32x2xf32>
    %cst_5 = arith.constant 0.000000e+00 : f32
    %6 = vector.broadcast %cst_5 : f32 to vector<32x2xf32>
    %7 = arith.maximumf %5, %6 : vector<32x2xf32>
    %c0_6 = arith.constant 0 : index
    %c0_7 = arith.constant 0 : index
    %8 = vector.load %arg3[%c0_6, %c0_7] : memref<4x32xf32, #tpu.memory_space<vmem>>, vector<4x32xf32>
    %cst_8 = arith.constant dense<0.000000e+00> : vector<4x2xf32>
    %9 = tpu.matmul %8, %7, %cst_8 {dimension_numbers = #tpu.dot_dimension_numbers<[1], [0], [0], [1], [0, 0, 1, 1], [], []>} : vector<4x32xf32>, vector<32x2xf32>, vector<4x2xf32> -> vector<4x2xf32>
    %10 = math.tanh %9 : vector<4x2xf32>
    %cst_9 = arith.constant 2.000000e+00 : f32
    %11 = vector.broadcast %cst_9 : f32 to vector<4x2xf32>
    %12 = arith.mulf %10, %11 : vector<4x2xf32>
    %c0_10 = arith.constant 0 : index
    %c0_11 = arith.constant 0 : index
    %13 = vector.load %arg4[%c0_10, %c0_11] : memref<4x2xf32, #tpu.memory_space<vmem>>, vector<4x2xf32>
    tpu.vector_store %arg4[%c0_10, %c0_11], %12 {strides = array<i32>} : memref<4x2xf32, #tpu.memory_space<vmem>>, vector<4x2xf32>,
    return
  }
}

</mosaic_0001>

<llo_original>
// kernel: tpu_custom_call.1
$region0: #{tpu_custom_call.1}
  #allocation0 [shape = 'u32[]', space=smem, size = 0x4, offset = 0x4, fixed_abs, tag = 'smem constant byte address 0x4 - core index']
  #allocation1 [shape = 'u32[72,128]{1,0:T(1,128)}', space=vmem, size = 0x9000, scoped, tag = 'internal scratch']
  %s0 = inlined_call_operand.vmem [shape: f32[8,2], index: 0, kind: input, shape index: {}]
  %s1 = inlined_call_operand.vmem [shape: f32[32,8], index: 1, kind: input, shape index: {}]
  %s2 = inlined_call_operand.vmem [shape: f32[32,1], index: 2, kind: input, shape index: {}]
  %s3 = inlined_call_operand.vmem [shape: f32[4,32], index: 3, kind: input, shape index: {}]
  %s4 = inlined_call_operand.vmem [shape: f32[4,2], index: 4, kind: output, shape index: {}]
  %s5 = sld [smem:[#allocation0]]
  $region26: #{tpu_custom_call.1} parent=0
    _
  %s7 = ssub.s32 1, %s5
  %s8 = scalar_select 0, %s7, %s5
  // Predicated region
  $region2: #{tpu_custom_call.1} parent=0 // pred_check
    _
  $region3: #{tpu_custom_call.1} parent=0 // pred_check_branch
    %10 = sbr.rel (0) target = $region5
  $region4: #{tpu_custom_call.1} parent=0 // pred_region
    _
  $region5: #{tpu_custom_call.1} parent=0 // pred_fallthru
    _
  // Predicated region
  $region6: #{tpu_custom_call.1} parent=0 // pred_check
    _
  $region7: #{tpu_custom_call.1} parent=0 // pred_check_branch
    %12 = sbr.rel (0) target = $region9
  $region8: #{tpu_custom_call.1} parent=0 // pred_region
    _
  $region9: #{tpu_custom_call.1} parent=0 // pred_fallthru
    _
  // Predicated region
  $region10: #{tpu_custom_call.1} parent=0 // pred_check
    _
  $region11: #{tpu_custom_call.1} parent=0 // pred_check_branch
    %14 = sbr.rel (0) target = $region13
  $region12: #{tpu_custom_call.1} parent=0 // pred_region
    _
  $region13: #{tpu_custom_call.1} parent=0 // pred_fallthru
    _
  // Predicated region
  $region14: #{tpu_custom_call.1} parent=0 // pred_check
    _
  $region15: #{tpu_custom_call.1} parent=0 // pred_check_branch
    %16 = sbr.rel (0) target = $region17
  $region16: #{tpu_custom_call.1} parent=0 // pred_region
    _
  $region17: #{tpu_custom_call.1} parent=0 // pred_fallthru
    _
  %v17 = vld [vmem:[%s1] sm:$0xff]
  %v18 = vld [vmem:[%s1 + $0x8] sm:$0xff]
  %v19 = vld [vmem:[%s1 + $0x10] sm:$0xff]
  %v20 = vld [vmem:[%s1 + $0x18] sm:$0xff]
  %v21 = vld [vmem:[%s0] sm:$0xff]
  %v22 = vld [vmem:[%s2] sm:$0xff]
  %v23 = vld [vmem:[%s2 + $0x8] sm:$0xff]
  %v24 = vld [vmem:[%s2 + $0x10] sm:$0xff]
  %v25 = vld [vmem:[%s2 + $0x18] sm:$0xff]
  %27 = vset.pattern.permute.xlu0 0
  %28 = vperm.xlu0 %27, %v22
  %v29 = vpop.permute.xlu0 %28
  %32 = vset.pattern.permute.xlu0 0
  %33 = vperm.xlu0 %32, %v23
  %v34 = vpop.permute.xlu0 %33
  %37 = vset.pattern.permute.xlu0 0
  %38 = vperm.xlu0 %37, %v24
  %v39 = vpop.permute.xlu0 %38
  %42 = vset.pattern.permute.xlu0 0
  %43 = vperm.xlu0 %42, %v25
  %v44 = vpop.permute.xlu0 %43
  %vm46 = vcmask 64512
  %v48 = vsel %vm46, %v17, 0
  %v51 = vsel %vm46, %v18, 0
  %v54 = vsel %vm46, %v19, 0
  %v57 = vsel %vm46, %v20, 0
  %59 = vmatpush.msra.mxu0 0.0
  %60 = vmatpush.msra.mxu0 0.0
  %61 = vmatpush.msra.mxu0 0.0
  %62 = vmatpush.msra.mxu0 0.0
  %63 = vmatpush.msra.mxu0 0.0
  %64 = vmatpush.msra.mxu0 0.0
  %65 = vmatpush.msra.mxu0 0.0
  %66 = vmatpush.msra.mxu0 0.0
  %67 = vmatpush.msra.mxu0 0.0
  %68 = vmatpush.msra.mxu0 0.0
  %69 = vmatpush.msra.mxu0 0.0
  %70 = vmatpush.msra.mxu0 0.0
  %71 = vmatpush.msra.mxu0 0.0
  %72 = vmatpush.msra.mxu0 0.0
  %73 = vmatpush.msra.mxu0 0.0
  %74 = vmatpush.msra.mxu0 %v21
  %75 = vmatmul.f32.gmra.mxu0 %v48
  %v76 = vpop.f32.mrf.mxu0
  %v77 = vadd.f32 %v29, %v76
  %78 = vmatmul.f32.gmra.mxu0 %v51
  %v79 = vpop.f32.mrf.mxu0
  %v80 = vadd.f32 %v34, %v79
  %81 = vmatmul.f32.gmra.mxu0 %v54
  %v82 = vpop.f32.mrf.mxu0
  %v83 = vadd.f32 %v39, %v82
  %84 = vmatmul.f32.gmra.mxu0 %v57
  %v85 = vpop.f32.mrf.mxu0
  %v86 = vadd.f32 %v44, %v85
  %87 = vdwg.mxu0
  %v88 = vmax.f32 %v77, 0.0
  %v89 = vmax.f32 %v80, 0.0
  %v90 = vmax.f32 %v83, 0.0
  %v91 = vmax.f32 %v86, 0.0
  %v92 = vld [vmem:[%s3] sm:$0xf]
  %vm93 = vcmask 261120
  %v95 = vsel %vm93, %v92, 0
  %97 = vmatpush.msra.mxu0 0.0
  %98 = vmatpush.msra.mxu0 0.0
  %99 = vmatpush.msra.mxu0 0.0
  %100 = vmatpush.msra.mxu0 0.0
  %101 = vmatpush.msra.mxu0 0.0
  %102 = vmatpush.msra.mxu0 0.0
  %103 = vmatpush.msra.mxu0 0.0
  %104 = vmatpush.msra.mxu0 0.0
  %105 = vmatpush.msra.mxu0 0.0
  %106 = vmatpush.msra.mxu0 0.0
  %107 = vmatpush.msra.mxu0 0.0
  %108 = vmatpush.msra.mxu0 0.0
  %109 = vmatpush.msra.mxu0 %v91
  %110 = vmatpush.msra.mxu0 %v90
  %111 = vmatpush.msra.mxu0 %v89
  %112 = vmatpush.msra.mxu0 %v88
  %113 = vmatmul.f32.gmra.mxu0 %v95
  %v114 = vpop.f32.mrf.mxu0
  %v115 = vadd.f32 0.0, %v114
  %116 = vdwg.mxu0
  %v117 = vtanh.pop %v115
  %v118 = vmul.f32 %v117, 2.0
  %vm119 = vcmask 11264
  %120 = vst.msk [vmem:[%s4] sm:$0xf] %vm119, %v118
  // Predicated region
  $region18: #{tpu_custom_call.1} parent=0 // pred_check
    _
  $region19: #{tpu_custom_call.1} parent=0 // pred_check_branch
    %122 = sbr.rel (0) target = $region21
  $region20: #{tpu_custom_call.1} parent=0 // pred_region
    _
  $region21: #{tpu_custom_call.1} parent=0 // pred_fallthru
    _
  // Predicated region
  $region22: #{tpu_custom_call.1} parent=0 // pred_check
    _
  $region23: #{tpu_custom_call.1} parent=0 // pred_check_branch
    %124 = sbr.rel (0) target = $region25
  $region24: #{tpu_custom_call.1} parent=0 // pred_region
    _
  $region25: #{tpu_custom_call.1} parent=0 // pred_fallthru
    _

</llo_original>
